<compile_context>
chip_gen: v5e
topology: v5e:2x2
jax: 0.10.0
libtpu: 0.0.40
codegen_flags: <defaults>
</compile_context>

<pallas_src>
import functools

import jax
import jax.numpy as jnp
from jax.experimental import pallas as pl
from jax.experimental.pallas import tpu as pltpu


def _conv1x1_bn_relu_kernel(x_ref, w_ref, bias_ref, o_ref, *, nb):
    # x_ref:    (nb, Cin, HW)   NCHW slab(s) -- no transpose anywhere
    # w_ref:    (Cout, Cin)     conv weight with BN scale pre-folded in
    # bias_ref: (Cout, 1)       folded BN bias = beta - mean * scale
    # o_ref:    (nb, Cout, HW)  lane-dense output (HW = 784 -> dense stores)
    w = w_ref[...]
    b = bias_ref[...]
    for i in range(nb):  # nb is small & static; one MXU matmul per image
        y = jnp.dot(w, x_ref[i], preferred_element_type=jnp.float32)
        o_ref[i] = jnp.maximum(y + b, 0.0).astype(o_ref.dtype)


def fold_bn_into_conv(w_oi, gamma, beta, running_mean, running_var, eps=1e-5):
    """Fold eval-mode BatchNorm into a 1x1 conv weight + per-channel bias.

    Call ONCE at parameter-load time; the result is what the kernel consumes.
    """
    scale = gamma / jnp.sqrt(running_var + eps)            # (Cout,)
    w_scaled = w_oi * scale[:, None]                        # (Cout, Cin)
    bias = (beta - running_mean * scale).reshape(-1, 1)     # (Cout, 1)
    return w_scaled, bias


@jax.jit
def conv1x1_bn_relu(x_nchw, w_scaled, bias):
    """Fused Conv2d(1x1, bias=False) + BatchNorm2d(inference) + ReLU.

    x_nchw   : (N, Cin, H, W) float32
    w_scaled : (Cout, Cin)    BN-folded conv weight (from fold_bn_into_conv)
    bias     : (Cout, 1)      BN-folded bias        (from fold_bn_into_conv)
    """
    N, Cin, H, W = x_nchw.shape
    Cout = w_scaled.shape[0]
    HW = H * W

    # Amortize per-grid-step overhead: largest divisor of N up to 8 images per
    # step (per-image VMEM slab is only ~150 KiB, so this stays tiny).
    block_n = max(d for d in range(1, min(N, 8) + 1) if N % d == 0)

    # NCHW consumed natively: (N, Cin, H, W) -> (N, Cin, H*W), pure reshape.
    x_slab = x_nchw.reshape(N, Cin, HW)

    kernel = functools.partial(_conv1x1_bn_relu_kernel, nb=block_n)
    out = pl.pallas_call(
        kernel,
        out_shape=jax.ShapeDtypeStruct((N, Cout, HW), x_nchw.dtype),
        grid=(N // block_n,),
        in_specs=[
            pl.BlockSpec((block_n, Cin, HW), lambda n: (n, 0, 0)),
            pl.BlockSpec((Cout, Cin), lambda n: (0, 0)),
            pl.BlockSpec((Cout, 1), lambda n: (0, 0)),
        ],
        out_specs=pl.BlockSpec((block_n, Cout, HW), lambda n: (n, 0, 0)),
        compiler_params=pltpu.CompilerParams(
            dimension_semantics=("parallel",),
        ),
    )(x_slab, w_scaled, bias)

    # (N, Cout, H*W) -> (N, Cout, H, W): pure reshape, no transpose.
    return out.reshape(N, Cout, H, W)


if __name__ == "__main__":
    key = jax.random.PRNGKey(0)
    k_x, k_w, k_g, k_b, k_m, k_v = jax.random.split(key, 6)

    # Shapes implied by the PyTorch module: x53 = randn([1, 24, 28, 28])
    N, C, Hh, Ww = 1, 24, 28, 28
    eps = 1e-5

    x = jax.random.normal(k_x, (N, C, Hh, Ww), dtype=jnp.float32)
    # Conv2d(24, 24, kernel_size=1, bias=False) weight: (Cout, Cin, 1, 1) -> (Cout, Cin)
    w = jax.random.normal(k_w, (C, C), dtype=jnp.float32) * 0.1
    # BatchNorm2d(24) parameters / running stats (deterministic synthetic values)
    gamma = jax.random.uniform(k_g, (C,), dtype=jnp.float32, minval=0.5, maxval=1.5)
    beta = jax.random.normal(k_b, (C,), dtype=jnp.float32) * 0.1
    running_mean = jax.random.normal(k_m, (C,), dtype=jnp.float32) * 0.1
    running_var = jax.random.uniform(k_v, (C,), dtype=jnp.float32, minval=0.5, maxval=1.5)

    # BN folding hoisted out of the per-call path (done once, here).
    w_scaled, bias = fold_bn_into_conv(w, gamma, beta, running_mean, running_var, eps)
    w_scaled = jax.block_until_ready(w_scaled)
    bias = jax.block_until_ready(bias)

    out = conv1x1_bn_relu(x, w_scaled, bias)
    jax.block_until_ready(out)

    # Plain-JAX reference (unfused, matches PyTorch eval-mode semantics).
    ref = jnp.einsum("oc,nchw->nohw", w, x)
    inv_std = 1.0 / jnp.sqrt(running_var + eps)
    ref = (ref - running_mean[None, :, None, None]) * inv_std[None, :, None, None]
    ref = ref * gamma[None, :, None, None] + beta[None, :, None, None]
    ref = jnp.maximum(ref, 0.0)

    assert out.shape == (N, C, Hh, Ww)
    assert jnp.allclose(out, ref, atol=2e-4, rtol=2e-4)

    print("KERNEL_OK")
</pallas_src>

<mosaic_0001>
module attributes {stable_mosaic.version = 11 : i64} {
  func.func @_conv1x1_bn_relu_kernel(%arg0: i32, %arg1: memref<1x24x784xf32, #tpu.memory_space<vmem>>, %arg2: memref<24x24xf32, #tpu.memory_space<vmem>>, %arg3: memref<24x1xf32, #tpu.memory_space<vmem>>, %arg4: memref<1x24x784xf32, #tpu.memory_space<vmem>>) attributes {dimension_semantics = [#tpu.dimension_semantics<parallel>], iteration_bounds = array<i64: 1>, scalar_prefetch = 0 : i64, scratch_operands = 0 : i64, tpu.core_type = #tpu.core_type<tc>, window_params = [{transform_indices = @transform_0, window_bounds = array<i64: 1, 24, 784>}, {pipeline_mode = #tpu.pipeline_mode<synchronous>, transform_indices = @transform_1, window_bounds = array<i64: 24, 24>}, {pipeline_mode = #tpu.pipeline_mode<synchronous>, transform_indices = @transform_2, window_bounds = array<i64: 24, 1>}, {transform_indices = @transform_3, window_bounds = array<i64: 1, 24, 784>}]} {
    %c0 = arith.constant 0 : index
    %c0_0 = arith.constant 0 : index
    %0 = vector.load %arg2[%c0, %c0_0] : memref<24x24xf32, #tpu.memory_space<vmem>>, vector<24x24xf32>
    %c0_1 = arith.constant 0 : index
    %c0_2 = arith.constant 0 : index
    %1 = vector.load %arg3[%c0_1, %c0_2] : memref<24x1xf32, #tpu.memory_space<vmem>>, vector<24x1xf32>
    %c0_3 = arith.constant 0 : index
    %c0_4 = arith.constant 0 : index
    %c0_5 = arith.constant 0 : index
    %2 = vector.load %arg1[%c0_3, %c0_4, %c0_5] : memref<1x24x784xf32, #tpu.memory_space<vmem>>, vector<1x24x784xf32>
    %3 = vector.shape_cast %2 : vector<1x24x784xf32> to vector<24x784xf32>
    %cst = arith.constant dense<0.000000e+00> : vector<24x784xf32>
    %4 = tpu.matmul %0, %3, %cst {dimension_numbers = #tpu.dot_dimension_numbers<[1], [0], [0], [1], [0, 0, 1, 1], [], []>} : vector<24x24xf32>, vector<24x784xf32>, vector<24x784xf32> -> vector<24x784xf32>
    %5 = vector.broadcast %1 : vector<24x1xf32> to vector<24x784xf32>
    %6 = arith.addf %4, %5 : vector<24x784xf32>
    %cst_6 = arith.constant 0.000000e+00 : f32
    %7 = vector.broadcast %cst_6 : f32 to vector<24x784xf32>
    %8 = arith.maximumf %6, %7 : vector<24x784xf32>
    %c0_7 = arith.constant 0 : index
    %c0_8 = arith.constant 0 : index
    %c0_9 = arith.constant 0 : index
    %9 = vector.load %arg4[%c0_7, %c0_8, %c0_9] : memref<1x24x784xf32, #tpu.memory_space<vmem>>, vector<1x24x784xf32>
    %10 = vector.shape_cast %9 : vector<1x24x784xf32> to vector<24x784xf32>
    %11 = vector.shape_cast %8 : vector<24x784xf32> to vector<1x24x784xf32>
    tpu.vector_store %arg4[%c0_7, %c0_8, %c0_9], %11 {strides = array<i32>} : memref<1x24x784xf32, #tpu.memory_space<vmem>>, vector<1x24x784xf32>,
    return
  }
  func.func @transform_0(%arg0: i32) -> (i32, i32, i32) {
    %c0_i32 = arith.constant 0 : i32
    %c0_i32_0 = arith.constant 0 : i32
    %c0_i32_1 = arith.constant 0 : i32
    return %arg0, %c0_i32, %c0_i32_0 : i32, i32, i32
  }
  func.func @transform_1(%arg0: i32) -> (i32, i32) {
    %c0_i32 = arith.constant 0 : i32
    %c0_i32_0 = arith.constant 0 : i32
    %c0_i32_1 = arith.constant 0 : i32
    return %c0_i32, %c0_i32_0 : i32, i32
  }
  func.func @transform_2(%arg0: i32) -> (i32, i32) {
    %c0_i32 = arith.constant 0 : i32
    %c0_i32_0 = arith.constant 0 : i32
    %c0_i32_1 = arith.constant 0 : i32
    return %c0_i32, %c0_i32_0 : i32, i32
  }
  func.func @transform_3(%arg0: i32) -> (i32, i32, i32) {
    %c0_i32 = arith.constant 0 : i32
    %c0_i32_0 = arith.constant 0 : i32
    %c0_i32_1 = arith.constant 0 : i32
    return %arg0, %c0_i32, %c0_i32_0 : i32, i32, i32
  }
}

</mosaic_0001>

<llo_original>
// kernel: conv1x1_bn_relu.1
$region0: #{conv1x1_bn_relu.1}
  #allocation0 [shape = 'u32[]', space=smem, size = 0x4, offset = 0x4, fixed_abs, tag = 'smem constant byte address 0x4 - core index']
  #allocation1 [shape = 'u32[72,128]{1,0:T(1,128)}', space=vmem, size = 0x9000, scoped, tag = 'internal scratch']
  %s0 = inlined_call_operand.vmem [shape: f32[1,24,784], index: 0, kind: input, shape index: {}]
  %s1 = inlined_call_operand.vmem [shape: f32[24,24], index: 1, kind: input, shape index: {}]
  %s2 = inlined_call_operand.vmem [shape: f32[24,1], index: 2, kind: input, shape index: {}]
  %s3 = inlined_call_operand.vmem [shape: f32[1,24,784], index: 3, kind: output, shape index: {}]
  %s4 = sld [smem:[#allocation0]]
  $region22: #{conv1x1_bn_relu.1} parent=0
    _
  %s6 = ssub.s32 1, %s4
  %s7 = scalar_select 0, %s6, %s4
  // Predicated region
  $region2: #{conv1x1_bn_relu.1} parent=0 // pred_check
    _
  $region3: #{conv1x1_bn_relu.1} parent=0 // pred_check_branch
    %9 = sbr.rel (0) target = $region5
  $region4: #{conv1x1_bn_relu.1} parent=0 // pred_region
    _
  $region5: #{conv1x1_bn_relu.1} parent=0 // pred_fallthru
    _
  // Predicated region
  $region6: #{conv1x1_bn_relu.1} parent=0 // pred_check
    _
  $region7: #{conv1x1_bn_relu.1} parent=0 // pred_check_branch
    %11 = sbr.rel (0) target = $region9
  $region8: #{conv1x1_bn_relu.1} parent=0 // pred_region
    _
  $region9: #{conv1x1_bn_relu.1} parent=0 // pred_fallthru
    _
  // Predicated region
  $region10: #{conv1x1_bn_relu.1} parent=0 // pred_check
    _
  $region11: #{conv1x1_bn_relu.1} parent=0 // pred_check_branch
    %13 = sbr.rel (0) target = $region13
  $region12: #{conv1x1_bn_relu.1} parent=0 // pred_region
    _
  $region13: #{conv1x1_bn_relu.1} parent=0 // pred_fallthru
    _
  %v14 = vld [vmem:[%s1] sm:$0xff]
  %v15 = vld [vmem:[%s1 + $0x8] sm:$0xff]
  %v16 = vld [vmem:[%s1 + $0x10] sm:$0xff]
  %v17 = vld [vmem:[%s2] sm:$0xff]
  %v18 = vld [vmem:[%s2 + $0x8] sm:$0xff]
  %v19 = vld [vmem:[%s2 + $0x10] sm:$0xff]
  %v20 = vld [vmem:[%s0] sm:$0xff]
  %v21 = vld [vmem:[%s0 + $0x8] sm:$0xff]
  %v22 = vld [vmem:[%s0 + $0x10] sm:$0xff]
  %v23 = vld [vmem:[%s0 + $0x18] sm:$0xff]
  %v24 = vld [vmem:[%s0 + $0x20] sm:$0xff]
  %v25 = vld [vmem:[%s0 + $0x28] sm:$0xff]
  %v26 = vld [vmem:[%s0 + $0x30] sm:$0xff]
  %v27 = vld [vmem:[%s0 + $0x38] sm:$0xff]
  %v28 = vld [vmem:[%s0 + $0x40] sm:$0xff]
  %v29 = vld [vmem:[%s0 + $0x48] sm:$0xff]
  %v30 = vld [vmem:[%s0 + $0x50] sm:$0xff]
  %v31 = vld [vmem:[%s0 + $0x58] sm:$0xff]
  %v32 = vld [vmem:[%s0 + $0x60] sm:$0xff]
  %v33 = vld [vmem:[%s0 + $0x68] sm:$0xff]
  %v34 = vld [vmem:[%s0 + $0x70] sm:$0xff]
  %v35 = vld [vmem:[%s0 + $0x78] sm:$0xff]
  %v36 = vld [vmem:[%s0 + $0x80] sm:$0xff]
  %v37 = vld [vmem:[%s0 + $0x88] sm:$0xff]
  %v38 = vld [vmem:[%s0 + $0x90] sm:$0xff]
  %v39 = vld [vmem:[%s0 + $0x98] sm:$0xff]
  %v40 = vld [vmem:[%s0 + $0xa0] sm:$0xff]
  %42 = vset.pattern.permute.xlu0 0
  %43 = vperm.xlu0 %42, %v17
  %v44 = vpop.permute.xlu0 %43
  %47 = vset.pattern.permute.xlu0 0
  %48 = vperm.xlu0 %47, %v18
  %v49 = vpop.permute.xlu0 %48
  %52 = vset.pattern.permute.xlu0 0
  %53 = vperm.xlu0 %52, %v19
  %v54 = vpop.permute.xlu0 %53
  %vm56 = vcmask 195584
  %v58 = vsel %vm56, %v14, 0
  %v61 = vsel %vm56, %v15, 0
  %v64 = vsel %vm56, %v16, 0
  %66 = vmatpush.msra.mxu0 0.0
  %67 = vmatpush.msra.mxu0 0.0
  %68 = vmatpush.msra.mxu0 0.0
  %69 = vmatpush.msra.mxu0 0.0
  %70 = vmatpush.msra.mxu0 0.0
  %71 = vmatpush.msra.mxu0 0.0
  %72 = vmatpush.msra.mxu0 0.0
  %73 = vmatpush.msra.mxu0 0.0
  %74 = vmatpush.msra.mxu0 0.0
  %75 = vmatpush.msra.mxu0 0.0
  %76 = vmatpush.msra.mxu0 0.0
  %77 = vmatpush.msra.mxu0 0.0
  %78 = vmatpush.msra.mxu0 0.0
  %79 = vmatpush.msra.mxu0 %v34
  %80 = vmatpush.msra.mxu0 %v27
  %81 = vmatpush.msra.mxu0 %v20
  %82 = vmatmul.f32.gmra.mxu0 %v58
  %v83 = vpop.f32.mrf.mxu0
  %v84 = vadd.f32 %v44, %v83
  %85 = vmatmul.f32.gmra.mxu0 %v61
  %v86 = vpop.f32.mrf.mxu0
  %v87 = vadd.f32 %v49, %v86
  %88 = vmatmul.f32.gmra.mxu0 %v64
  %v89 = vpop.f32.mrf.mxu0
  %v90 = vadd.f32 %v54, %v89
  %91 = vdwg.mxu0
  %92 = vmatpush.msra.mxu0 0.0
  %93 = vmatpush.msra.mxu0 0.0
  %94 = vmatpush.msra.mxu0 0.0
  %95 = vmatpush.msra.mxu0 0.0
  %96 = vmatpush.msra.mxu0 0.0
  %97 = vmatpush.msra.mxu0 0.0
  %98 = vmatpush.msra.mxu0 0.0
  %99 = vmatpush.msra.mxu0 0.0
  %100 = vmatpush.msra.mxu0 0.0
  %101 = vmatpush.msra.mxu0 0.0
  %102 = vmatpush.msra.mxu0 0.0
  %103 = vmatpush.msra.mxu0 0.0
  %104 = vmatpush.msra.mxu0 0.0
  %105 = vmatpush.msra.mxu0 %v35
  %106 = vmatpush.msra.mxu0 %v28
  %107 = vmatpush.msra.mxu0 %v21
  %108 = vmatmul.f32.gmra.mxu0 %v58
  %v109 = vpop.f32.mrf.mxu0
  %v110 = vadd.f32 %v44, %v109
  %111 = vmatmul.f32.gmra.mxu0 %v61
  %v112 = vpop.f32.mrf.mxu0
  %v113 = vadd.f32 %v49, %v112
  %114 = vmatmul.f32.gmra.mxu0 %v64
  %v115 = vpop.f32.mrf.mxu0
  %v116 = vadd.f32 %v54, %v115
  %117 = vdwg.mxu0
  %118 = vmatpush.msra.mxu0 0.0
  %119 = vmatpush.msra.mxu0 0.0
  %120 = vmatpush.msra.mxu0 0.0
  %121 = vmatpush.msra.mxu0 0.0
  %122 = vmatpush.msra.mxu0 0.0
  %123 = vmatpush.msra.mxu0 0.0
  %124 = vmatpush.msra.mxu0 0.0
  %125 = vmatpush.msra.mxu0 0.0
  %126 = vmatpush.msra.mxu0 0.0
  %127 = vmatpush.msra.mxu0 0.0
  %128 = vmatpush.msra.mxu0 0.0
  %129 = vmatpush.msra.mxu0 0.0
  %130 = vmatpush.msra.mxu0 0.0
  %131 = vmatpush.msra.mxu0 %v36
  %132 = vmatpush.msra.mxu0 %v29
  %133 = vmatpush.msra.mxu0 %v22
  %134 = vmatmul.f32.gmra.mxu0 %v58
  %v135 = vpop.f32.mrf.mxu0
  %v136 = vadd.f32 %v44, %v135
  %137 = vmatmul.f32.gmra.mxu0 %v61
  %v138 = vpop.f32.mrf.mxu0
  %v139 = vadd.f32 %v49, %v138
  %140 = vmatmul.f32.gmra.mxu0 %v64
  %v141 = vpop.f32.mrf.mxu0
  %v142 = vadd.f32 %v54, %v141
  %143 = vdwg.mxu0
  %144 = vmatpush.msra.mxu0 0.0
  %145 = vmatpush.msra.mxu0 0.0
  %146 = vmatpush.msra.mxu0 0.0
  %147 = vmatpush.msra.mxu0 0.0
  %148 = vmatpush.msra.mxu0 0.0
  %149 = vmatpush.msra.mxu0 0.0
  %150 = vmatpush.msra.mxu0 0.0
  %151 = vmatpush.msra.mxu0 0.0
  %152 = vmatpush.msra.mxu0 0.0
  %153 = vmatpush.msra.mxu0 0.0
  %154 = vmatpush.msra.mxu0 0.0
  %155 = vmatpush.msra.mxu0 0.0
  %156 = vmatpush.msra.mxu0 0.0
  %157 = vmatpush.msra.mxu0 %v37
  %158 = vmatpush.msra.mxu0 %v30
  %159 = vmatpush.msra.mxu0 %v23
  %160 = vmatmul.f32.gmra.mxu0 %v58
  %v161 = vpop.f32.mrf.mxu0
  %v162 = vadd.f32 %v44, %v161
  %163 = vmatmul.f32.gmra.mxu0 %v61
  %v164 = vpop.f32.mrf.mxu0
  %v165 = vadd.f32 %v49, %v164
  %166 = vmatmul.f32.gmra.mxu0 %v64
  %v167 = vpop.f32.mrf.mxu0
  %v168 = vadd.f32 %v54, %v167
  %169 = vdwg.mxu0
  %170 = vmatpush.msra.mxu0 0.0
  %171 = vmatpush.msra.mxu0 0.0
  %172 = vmatpush.msra.mxu0 0.0
  %173 = vmatpush.msra.mxu0 0.0
  %174 = vmatpush.msra.mxu0 0.0
  %175 = vmatpush.msra.mxu0 0.0
  %176 = vmatpush.msra.mxu0 0.0
  %177 = vmatpush.msra.mxu0 0.0
  %178 = vmatpush.msra.mxu0 0.0
  %179 = vmatpush.msra.mxu0 0.0
  %180 = vmatpush.msra.mxu0 0.0
  %181 = vmatpush.msra.mxu0 0.0
  %182 = vmatpush.msra.mxu0 0.0
  %183 = vmatpush.msra.mxu0 %v38
  %184 = vmatpush.msra.mxu0 %v31
  %185 = vmatpush.msra.mxu0 %v24
  %186 = vmatmul.f32.gmra.mxu0 %v58
  %v187 = vpop.f32.mrf.mxu0
  %v188 = vadd.f32 %v44, %v187
  %189 = vmatmul.f32.gmra.mxu0 %v61
  %v190 = vpop.f32.mrf.mxu0
  %v191 = vadd.f32 %v49, %v190
  %192 = vmatmul.f32.gmra.mxu0 %v64
  %v193 = vpop.f32.mrf.mxu0
  %v194 = vadd.f32 %v54, %v193
  %195 = vdwg.mxu0
  %196 = vmatpush.msra.mxu0 0.0
  %197 = vmatpush.msra.mxu0 0.0
  %198 = vmatpush.msra.mxu0 0.0
  %199 = vmatpush.msra.mxu0 0.0
  %200 = vmatpush.msra.mxu0 0.0
  %201 = vmatpush.msra.mxu0 0.0
  %202 = vmatpush.msra.mxu0 0.0
  %203 = vmatpush.msra.mxu0 0.0
  %204 = vmatpush.msra.mxu0 0.0
  %205 = vmatpush.msra.mxu0 0.0
  %206 = vmatpush.msra.mxu0 0.0
  %207 = vmatpush.msra.mxu0 0.0
  %208 = vmatpush.msra.mxu0 0.0
  %209 = vmatpush.msra.mxu0 %v39
  %210 = vmatpush.msra.mxu0 %v32
  %211 = vmatpush.msra.mxu0 %v25
  %212 = vmatmul.f32.gmra.mxu0 %v58
  %v213 = vpop.f32.mrf.mxu0
  %v214 = vadd.f32 %v44, %v213
  %215 = vmatmul.f32.gmra.mxu0 %v61
  %v216 = vpop.f32.mrf.mxu0
  %v217 = vadd.f32 %v49, %v216
  %218 = vmatmul.f32.gmra.mxu0 %v64
  %v219 = vpop.f32.mrf.mxu0
  %v220 = vadd.f32 %v54, %v219
  %221 = vdwg.mxu0
  %222 = vmatpush.msra.mxu0 0.0
  %223 = vmatpush.msra.mxu0 0.0
  %224 = vmatpush.msra.mxu0 0.0
  %225 = vmatpush.msra.mxu0 0.0
  %226 = vmatpush.msra.mxu0 0.0
  %227 = vmatpush.msra.mxu0 0.0
  %228 = vmatpush.msra.mxu0 0.0
  %229 = vmatpush.msra.mxu0 0.0
  %230 = vmatpush.msra.mxu0 0.0
  %231 = vmatpush.msra.mxu0 0.0
  %232 = vmatpush.msra.mxu0 0.0
  %233 = vmatpush.msra.mxu0 0.0
  %234 = vmatpush.msra.mxu0 0.0
  %235 = vmatpush.msra.mxu0 %v40
  %236 = vmatpush.msra.mxu0 %v33
  %237 = vmatpush.msra.mxu0 %v26
  %238 = vmatmul.f32.gmra.mxu0 %v58
  %v239 = vpop.f32.mrf.mxu0
  %v240 = vadd.f32 %v44, %v239
  %241 = vmatmul.f32.gmra.mxu0 %v61
  %v242 = vpop.f32.mrf.mxu0
  %v243 = vadd.f32 %v49, %v242
  %244 = vmatmul.f32.gmra.mxu0 %v64
  %v245 = vpop.f32.mrf.mxu0
  %v246 = vadd.f32 %v54, %v245
  %247 = vdwg.mxu0
  %v248 = vmax.f32 %v84, 0.0
  %v249 = vmax.f32 %v110, 0.0
  %v250 = vmax.f32 %v136, 0.0
  %v251 = vmax.f32 %v162, 0.0
  %v252 = vmax.f32 %v188, 0.0
  %v253 = vmax.f32 %v214, 0.0
  %v254 = vmax.f32 %v240, 0.0
  %v255 = vmax.f32 %v87, 0.0
  %v256 = vmax.f32 %v113, 0.0
  %v257 = vmax.f32 %v139, 0.0
  %v258 = vmax.f32 %v165, 0.0
  %v259 = vmax.f32 %v191, 0.0
  %v260 = vmax.f32 %v217, 0.0
  %v261 = vmax.f32 %v243, 0.0
  %v262 = vmax.f32 %v90, 0.0
  %v263 = vmax.f32 %v116, 0.0
  %v264 = vmax.f32 %v142, 0.0
  %v265 = vmax.f32 %v168, 0.0
  %v266 = vmax.f32 %v194, 0.0
  %v267 = vmax.f32 %v220, 0.0
  %v268 = vmax.f32 %v246, 0.0
  %269 = vst [vmem:[%s3] sm:$0xff] %v248
  %270 = vst [vmem:[%s3 + $0x8] sm:$0xff] %v249
  %271 = vst [vmem:[%s3 + $0x10] sm:$0xff] %v250
  %272 = vst [vmem:[%s3 + $0x18] sm:$0xff] %v251
  %273 = vst [vmem:[%s3 + $0x20] sm:$0xff] %v252
  %274 = vst [vmem:[%s3 + $0x28] sm:$0xff] %v253
  %vm275 = vcmask 130048
  %276 = vst.msk [vmem:[%s3 + $0x30] sm:$0xff] %vm275, %v254
  %277 = vst [vmem:[%s3 + $0x38] sm:$0xff] %v255
  %278 = vst [vmem:[%s3 + $0x40] sm:$0xff] %v256
  %279 = vst [vmem:[%s3 + $0x48] sm:$0xff] %v257
  %280 = vst [vmem:[%s3 + $0x50] sm:$0xff] %v258
  %281 = vst [vmem:[%s3 + $0x58] sm:$0xff] %v259
  %282 = vst [vmem:[%s3 + $0x60] sm:$0xff] %v260
  %283 = vst.msk [vmem:[%s3 + $0x68] sm:$0xff] %vm275, %v261
  %284 = vst [vmem:[%s3 + $0x70] sm:$0xff] %v262
  %285 = vst [vmem:[%s3 + $0x78] sm:$0xff] %v263
  %286 = vst [vmem:[%s3 + $0x80] sm:$0xff] %v264
  %287 = vst [vmem:[%s3 + $0x88] sm:$0xff] %v265
  %288 = vst [vmem:[%s3 + $0x90] sm:$0xff] %v266
  %289 = vst [vmem:[%s3 + $0x98] sm:$0xff] %v267
  %290 = vst.msk [vmem:[%s3 + $0xa0] sm:$0xff] %vm275, %v268
  // Predicated region
  $region14: #{conv1x1_bn_relu.1} parent=0 // pred_check
    _
  $region15: #{conv1x1_bn_relu.1} parent=0 // pred_check_branch
    %292 = sbr.rel (0) target = $region17
  $region16: #{conv1x1_bn_relu.1} parent=0 // pred_region
    _
  $region17: #{conv1x1_bn_relu.1} parent=0 // pred_fallthru
    _
  // Predicated region
  $region18: #{conv1x1_bn_relu.1} parent=0 // pred_check
    _
  $region19: #{conv1x1_bn_relu.1} parent=0 // pred_check_branch
    %294 = sbr.rel (0) target = $region21
  $region20: #{conv1x1_bn_relu.1} parent=0 // pred_region
    _
  $region21: #{conv1x1_bn_relu.1} parent=0 // pred_fallthru
    _

</llo_original>
